<compile_context>
chip_gen: v7x
topology: tpu7x:2x2x1
jax: 0.10.0
libtpu: 0.0.40
codegen_flags: <defaults>
</compile_context>

<pallas_src>
import functools

import jax
import jax.numpy as jnp
from jax.experimental import pallas as pl
from jax.experimental.pallas import tpu as pltpu


def _round_up(v, m):
    return ((v + m - 1) // m) * m


def _focal_loss_kernel(x_ref, t_ref, out_ref, acc_ref, *,
                       gamma, n_rows, tiles_per_split):
    s = pl.program_id(0)          # "parallel" split (TensorCore) axis
    i = pl.program_id(1)          # "arbitrary" reduction axis over row tiles

    # Per-split accumulator init.
    @pl.when(i == 0)
    def _():
        acc_ref[0] = jnp.float32(0.0)

    x = x_ref[...].astype(jnp.float32)      # (TILE_N, C); upcast if bf16 input
    t = t_ref[...]                          # (TILE_N, 1) int32
    tile_n, c = x.shape

    # Validity mask for rows of this tile (handles N % TILE_N != 0 and
    # clamped / duplicated tiles when num_tiles % n_splits != 0).
    global_tile = s * tiles_per_split + i
    row = global_tile * tile_n + jax.lax.broadcasted_iota(
        jnp.int32, (tile_n, 1), 0)
    valid = row < n_rows                    # (TILE_N, 1) bool

    xm = jnp.where(valid, x, 0.0)           # keep padded rows finite

    # Row-wise logsumexp: the only place the full row is needed (one exp/row).
    m = jnp.max(xm, axis=1, keepdims=True)
    lse = m + jnp.log(jnp.sum(jnp.exp(xm - m), axis=1, keepdims=True))

    # Gather the target-class logit per row via a one-hot compare.
    cls = jax.lax.broadcasted_iota(jnp.int32, (tile_n, c), 1)
    one_hot = (cls == t).astype(jnp.float32)
    x_t = jnp.sum(xm * one_hot, axis=1, keepdims=True)      # (TILE_N, 1)

    # Focal modulation only on the gathered column (TILE_N elements).
    logpt_t = x_t - lse
    pt_t = jnp.exp(logpt_t)
    focal_t = ((1.0 - pt_t) ** gamma) * logpt_t             # gamma: Python int

    acc_ref[0] += jnp.sum(jnp.where(valid, -focal_t, 0.0))

    # Flush this split's partial sum as a lane-dense block.
    @pl.when(i == tiles_per_split - 1)
    def _():
        out_ref[...] = jnp.full(out_ref.shape, acc_ref[0], dtype=jnp.float32)


def focal_loss(x, target, gamma=2, *, tile_n=None, n_splits=2):
    """x: [N, C] float32 (or bf16), target: [N] int -> scalar float32 loss."""
    n, c = x.shape

    # Keep gamma an int when possible: integer_pow on the VPU instead of
    # exp(gamma * log(1 - pt)) on the single EUP.
    if isinstance(gamma, float) and gamma.is_integer():
        gamma = int(gamma)

    # Row-tile size: a multiple of 8 sublanes, or the full N.
    if tile_n is None:
        tile_n = n if n <= 512 else 512
    tile_n = min(_round_up(tile_n, 8), _round_up(n, 8))
    if tile_n >= n:
        tile_n = n

    num_tiles = pl.cdiv(n, tile_n)
    n_splits = max(1, min(n_splits, num_tiles))
    tiles_per_split = pl.cdiv(num_tiles, n_splits)

    def tile_index(s, i):
        # Clamp so a split whose range runs past num_tiles re-reads the last
        # valid tile; those rows are masked out inside the kernel.
        return jnp.minimum(s * tiles_per_split + i, num_tiles - 1)

    t2 = target.reshape(n, 1).astype(jnp.int32)

    kernel = functools.partial(_focal_loss_kernel, gamma=gamma, n_rows=n,
                               tiles_per_split=tiles_per_split)

    partial_sums = pl.pallas_call(
        kernel,
        out_shape=jax.ShapeDtypeStruct((n_splits, 8, 128), jnp.float32),
        grid_spec=pltpu.PrefetchScalarGridSpec(
            num_scalar_prefetch=0,
            grid=(n_splits, tiles_per_split),
            in_specs=[
                pl.BlockSpec((tile_n, c), lambda s, i: (tile_index(s, i), 0)),
                pl.BlockSpec((tile_n, 1), lambda s, i: (tile_index(s, i), 0)),
            ],
            out_specs=pl.BlockSpec((1, 8, 128), lambda s, i: (s, 0, 0)),
            scratch_shapes=[pltpu.SMEM((1,), jnp.float32)],
        ),
        compiler_params=pltpu.CompilerParams(
            dimension_semantics=("parallel", "arbitrary")),
    )(x, t2)

    # nll_loss(weight=None, reduction='mean'): divide by N exactly once.
    return jnp.sum(partial_sums[:, 0, 0]) / jnp.float32(n)


def _focal_loss_ref(x, target, gamma=2):
    logpt = jax.nn.log_softmax(x.astype(jnp.float32), axis=1)
    pt = jnp.exp(logpt)
    logpt = ((1.0 - pt) ** gamma) * logpt
    picked = jnp.take_along_axis(logpt, target[:, None].astype(jnp.int32), axis=1)
    return jnp.mean(-picked)


if __name__ == "__main__":
    key = jax.random.PRNGKey(0)
    kx, kt = jax.random.split(key)
    N, C = 400, 32          # small, but big enough to exercise the row tiling
    x = jax.random.normal(kx, (N, C), dtype=jnp.float32)
    # target is int64 in PyTorch; JAX TPU uses int32 indices here.
    target = jax.random.randint(kt, (N,), 0, C, dtype=jnp.int32)

    ref = _focal_loss_ref(x, target, gamma=2)

    # Tiled + 2-way split path (exercises the grid, clamped tiles, masking).
    loss = jax.block_until_ready(
        focal_loss(x, target, gamma=2, tile_n=128, n_splits=2))
    assert jnp.allclose(loss, ref, atol=1e-5, rtol=1e-4), (loss, ref)

    # Default auto-tiled path (single tile here since N <= 512).
    loss2 = jax.block_until_ready(focal_loss(x, target, gamma=2))
    assert jnp.allclose(loss2, ref, atol=1e-5, rtol=1e-4), (loss2, ref)

    print("KERNEL_OK")
</pallas_src>

<mosaic_0001>
module attributes {stable_mosaic.version = 11 : i64} {
  func.func @_focal_loss_kernel(%arg0: i32, %arg1: i32, %arg2: memref<128x32xf32, #tpu.memory_space<vmem>>, %arg3: memref<128x1xi32, #tpu.memory_space<vmem>>, %arg4: memref<1x8x128xf32, #tpu.memory_space<vmem>>, %arg5: memref<1xf32, #tpu.memory_space<smem>>) attributes {dimension_semantics = [#tpu.dimension_semantics<parallel>, #tpu.dimension_semantics<arbitrary>], iteration_bounds = array<i64: 2, 2>, scalar_prefetch = 0 : i64, scratch_operands = 1 : i64, tpu.core_type = #tpu.core_type<tc>, window_params = [{transform_indices = @transform_0, window_bounds = array<i64: 128, 32>}, {transform_indices = @transform_1, window_bounds = array<i64: 128, 1>}, {transform_indices = @transform_2, window_bounds = array<i64: 1, 8, 128>}]} {
    %c0_i32 = arith.constant 0 : i32
    %0 = arith.cmpi eq, %arg1, %c0_i32 : i32
    %1 = arith.extui %0 : i1 to i32
    %c0_i32_0 = arith.constant 0 : i32
    %2 = arith.cmpi ne, %1, %c0_i32_0 : i32
    scf.if %2 {
      %cst_14 = arith.constant 0.000000e+00 : f32
      %c0_15 = arith.constant 0 : index
      %54 = memref.load %arg5[%c0_15] : memref<1xf32, #tpu.memory_space<smem>>
      memref.store %cst_14, %arg5[%c0_15] : memref<1xf32, #tpu.memory_space<smem>>
    } else {
    }
    %c0 = arith.constant 0 : index
    %c0_1 = arith.constant 0 : index
    %3 = vector.load %arg2[%c0, %c0_1] : memref<128x32xf32, #tpu.memory_space<vmem>>, vector<128x32xf32>
    %c0_2 = arith.constant 0 : index
    %c0_3 = arith.constant 0 : index
    %4 = vector.load %arg3[%c0_2, %c0_3] : memref<128x1xi32, #tpu.memory_space<vmem>>, vector<128x1xi32>
    %c2_i32 = arith.constant 2 : i32
    %5 = arith.muli %arg0, %c2_i32 : i32
    %6 = arith.addi %5, %arg1 : i32
    %c128_i32 = arith.constant 128 : i32
    %7 = arith.muli %6, %c128_i32 : i32
    %8 = tpu.iota {dimensions = array<i32: 0>} : vector<128x1xi32>
    %9 = vector.broadcast %7 : i32 to vector<128x1xi32>
    %10 = arith.addi %9, %8 : vector<128x1xi32>
    %c400_i32 = arith.constant 400 : i32
    %11 = vector.broadcast %c400_i32 : i32 to vector<128x1xi32>
    %12 = arith.cmpi slt, %10, %11 : vector<128x1xi32>
    %cst = arith.constant 0.000000e+00 : f32
    %13 = vector.shape_cast %12 : vector<128x1xi1> to vector<128x1xi1>
    %14 = vector.broadcast %13 : vector<128x1xi1> to vector<128x32xi1>
    %15 = vector.broadcast %cst : f32 to vector<128x32xf32>
    %16 = arith.select %14, %3, %15 : vector<128x32xi1>, vector<128x32xf32>
    %cst_4 = arith.constant dense<0xFF800000> : vector<128xf32>
    %17 = vector.multi_reduction <maximumf>, %16, %cst_4 [1] : vector<128x32xf32> to vector<128xf32>
    %18 = vector.shape_cast %17 : vector<128xf32> to vector<128x1xf32>
    %19 = vector.broadcast %18 : vector<128x1xf32> to vector<128x32xf32>
    %20 = arith.subf %16, %19 : vector<128x32xf32>
    %21 = math.exp %20 : vector<128x32xf32>
    %cst_5 = arith.constant dense<0.000000e+00> : vector<128xf32>
    %22 = vector.multi_reduction <add>, %21, %cst_5 [1] : vector<128x32xf32> to vector<128xf32>
    %23 = vector.shape_cast %22 : vector<128xf32> to vector<128x1xf32>
    %24 = math.log %23 : vector<128x1xf32>
    %25 = arith.addf %18, %24 : vector<128x1xf32>
    %26 = tpu.iota {dimensions = array<i32: 1>} : vector<128x32xi32>
    %27 = vector.broadcast %4 : vector<128x1xi32> to vector<128x32xi32>
    %28 = arith.cmpi eq, %26, %27 : vector<128x32xi32>
    %29 = arith.extui %28 : vector<128x32xi1> to vector<128x32xi32>
    %30 = arith.sitofp %29 : vector<128x32xi32> to vector<128x32xf32>
    %31 = arith.mulf %16, %30 : vector<128x32xf32>
    %cst_6 = arith.constant dense<0.000000e+00> : vector<128xf32>
    %32 = vector.multi_reduction <add>, %31, %cst_6 [1] : vector<128x32xf32> to vector<128xf32>
    %33 = vector.shape_cast %32 : vector<128xf32> to vector<128x1xf32>
    %34 = arith.subf %33, %25 : vector<128x1xf32>
    %35 = math.exp %34 : vector<128x1xf32>
    %cst_7 = arith.constant 1.000000e+00 : f32
    %36 = vector.broadcast %cst_7 : f32 to vector<128x1xf32>
    %37 = arith.subf %36, %35 : vector<128x1xf32>
    %38 = arith.mulf %37, %37 : vector<128x1xf32>
    %39 = arith.mulf %38, %34 : vector<128x1xf32>
    %c0_8 = arith.constant 0 : index
    %40 = memref.load %arg5[%c0_8] : memref<1xf32, #tpu.memory_space<smem>>
    %cst_9 = arith.constant 0.000000e+00 : f32
    %41 = vector.broadcast %cst_9 : f32 to vector<128x1xf32>
    %42 = arith.subf %41, %39 : vector<128x1xf32>
    %cst_10 = arith.constant 0.000000e+00 : f32
    %43 = vector.broadcast %cst_10 : f32 to vector<128x1xf32>
    %44 = arith.select %12, %42, %43 : vector<128x1xi1>, vector<128x1xf32>
    %45 = vector.shape_cast %44 : vector<128x1xf32> to vector<1x128x1xf32>
    %cst_11 = arith.constant dense<0.000000e+00> : vector<1xf32>
    %46 = vector.multi_reduction <add>, %45, %cst_11 [1, 2] : vector<1x128x1xf32> to vector<1xf32>
    %47 = vector.shape_cast %46 : vector<1xf32> to vector<1x1x1xf32>
    %48 = vector.extract %47[0, 0, 0] : f32 from vector<1x1x1xf32>
    %49 = arith.addf %40, %48 : f32
    %c0_12 = arith.constant 0 : index
    %50 = memref.load %arg5[%c0_12] : memref<1xf32, #tpu.memory_space<smem>>
    memref.store %49, %arg5[%c0_12] : memref<1xf32, #tpu.memory_space<smem>>
    %c1_i32 = arith.constant 1 : i32
    %51 = arith.cmpi eq, %arg1, %c1_i32 : i32
    %52 = arith.extui %51 : i1 to i32
    %c0_i32_13 = arith.constant 0 : i32
    %53 = arith.cmpi ne, %52, %c0_i32_13 : i32
    scf.if %53 {
      %c0_14 = arith.constant 0 : index
      %54 = memref.load %arg5[%c0_14] : memref<1xf32, #tpu.memory_space<smem>>
      %55 = vector.broadcast %54 : f32 to vector<1x8x128xf32>
      %c0_15 = arith.constant 0 : index
      %c0_16 = arith.constant 0 : index
      %c0_17 = arith.constant 0 : index
      %56 = vector.load %arg4[%c0_15, %c0_16, %c0_17] : memref<1x8x128xf32, #tpu.memory_space<vmem>>, vector<1x8x128xf32>
      tpu.vector_store %arg4[%c0_15, %c0_16, %c0_17], %55 {strides = array<i32>} : memref<1x8x128xf32, #tpu.memory_space<vmem>>, vector<1x8x128xf32>,
    } else {
    }
    return
  }
  func.func @transform_0(%arg0: i32, %arg1: i32) -> (i32, i32) {
    %c2_i32 = arith.constant 2 : i32
    %0 = arith.muli %arg0, %c2_i32 : i32
    %1 = arith.addi %0, %arg1 : i32
    %c3_i32 = arith.constant 3 : i32
    %2 = arith.minsi %1, %c3_i32 : i32
    %c0_i32 = arith.constant 0 : i32
    %c0_i32_0 = arith.constant 0 : i32
    return %2, %c0_i32 : i32, i32
  }
  func.func @transform_1(%arg0: i32, %arg1: i32) -> (i32, i32) {
    %c2_i32 = arith.constant 2 : i32
    %0 = arith.muli %arg0, %c2_i32 : i32
    %1 = arith.addi %0, %arg1 : i32
    %c3_i32 = arith.constant 3 : i32
    %2 = arith.minsi %1, %c3_i32 : i32
    %c0_i32 = arith.constant 0 : i32
    %c0_i32_0 = arith.constant 0 : i32
    return %2, %c0_i32 : i32, i32
  }
  func.func @transform_2(%arg0: i32, %arg1: i32) -> (i32, i32, i32) {
    %c0_i32 = arith.constant 0 : i32
    %c0_i32_0 = arith.constant 0 : i32
    %c0_i32_1 = arith.constant 0 : i32
    return %arg0, %c0_i32, %c0_i32_0 : i32, i32, i32
  }
}

</mosaic_0001>

<llo_original>
// kernel: tpu_custom_call.1
$region0: #{tpu_custom_call.1}
  #allocation0 [shape = 'u32[]', space=smem, size = 0x4, offset = 0x4, fixed_abs, tag = 'smem constant byte address 0x4 - core index']
  #allocation1 [shape = 'u32[144,128]{1,0:T(1,128)}', space=vmem, size = 0x12000, scoped, tag = 'internal scratch']
  #allocation2 [shape = 'f32[1]{0:T(128)}', space=smem, size = 0x200, scoped, tag = 'scratch operand']
  %s0 = inlined_call_operand.vmem [shape: f32[400,32], index: 0, kind: input, shape index: {}]
  %s1 = inlined_call_operand.vmem [shape: s32[400,1], index: 1, kind: input, shape index: {}]
  %s2 = inlined_call_operand.hbm [shape: f32[2,8,128], index: 2, kind: output, shape index: {}]
  %s3 = sld [smem:[#allocation0]]
  $region49: #{tpu_custom_call.1} parent=0
    _
  %s5 = ssub.s32 1, %s3
  %s6 = scalar_select 0, %s5, %s3
  $region1: #{tpu_custom_call.1} parent=0
    #allocation3 [shape = 'u8[8192]{0}', space=vmem, size = 0x2000, scoped, tag = 'output window, operand 0']
    #allocation4 [shape = 's32[2]{0}', space=sflag, size = 0x8, scoped, tag = 'scoped memory for tpu_custom_call.1']
    %7 = vsyncpa [#allocation4], 0
    %s8 = scalar_lea.sflag [#allocation4], 1
    %9 = vsyncpa %s8, 0
    loop: start=0, step=1, limit=6
    $region2: #{tpu_custom_call.1} parent=1 // loop_pre_header
      _
    $region3: #{tpu_custom_call.1} parent=1 // loop_header
      %s11 = sphi 0, %s15
      %p12 = scmp.ge.s32.totalorder %s11, 6
      %s18 = sphi 0, %s30
      %s19 = sphi 0, %s26
      %s20 = sphi 0, %s18
      %s21 = sphi 0, %s19
      %s22 = sphi 0, %s20
      %s23 = sphi 0, %s21
      %s41 = sphi 0, %s43
      %s44 = sphi 0, %s41
      %s45 = sphi 0, %s44
      %s61 = sphi 0, %s45
      %s75 = sphi 0, %s77
      %s78 = sphi 0, %s75
      %s79 = sphi 0, %s78
      %s95 = sphi 0, %s79
      %s101 = sphi 0, %s103
      %s104 = sphi 0, %s101
      %s105 = sphi 0, %s104
      %s121 = sphi 0, %s105
    $region4: #{tpu_custom_call.1} parent=1 // loop_header_branch
      %14 = sbr.rel (%p12) target = $region8
    $region5: #{tpu_custom_call.1} parent=1 // loop_body
      %s16 = ssub.s32 %s11, 1
      %s17 = ssub.s32 %s11, 2
      %s24 = sadd.s32 1, %s19
      %p25 = scmp.ge.s32.totalorder %s24, 2
      %s26 = scalar_select %p25, 0, %s24
      %s27 = sadd.s32 1, %s18
      %s28 = scalar_select %p25, %s27, %s18
      %p29 = scmp.ge.s32.totalorder %s28, 2
      %s30 = scalar_select %p29, 0, %s28
      %s31 = smul.u32 %s18, 2
      %s32 = sadd.s32 %s31, %s19
      %p33 = scmp.lt.s32.totalorder %s32, 3
      %s34 = scalar_select %p33, %s32, 3
      %s35 = smul.u32 %s30, 2
      %s36 = sadd.s32 %s35, %s26
      %p37 = scmp.lt.s32.totalorder %s36, 3
      %s38 = scalar_select %p37, %s36, 3
      %s39 = ssub.s32 %s34, %s38
      %p40 = scmp.eq.s32.totalorder %s39, 0
      %s42 = sadd.s32 %s41, 1
      %s43 = scalar_select %p40, %s41, %s42
      %p46 = pneg %p40
      %p47 = scmp.eq.s32.totalorder %s11, 3
      %p48 = por %p46, %p47
      %p49 = scmp.ne.s32.totalorder %s41, %s44
      %p50 = scmp.eq.s32.totalorder %s11, 0
      %p51 = por %p49, %p50
      %p52 = scmp.ne.s32.totalorder %s41, %s44
      %p53 = scmp.eq.s32.totalorder %s16, 3
      %p54 = por %p52, %p53
      %p55 = scmp.ne.s32.totalorder %s44, %s45
      %p56 = scmp.eq.s32.totalorder %s16, 0
      %p57 = por %p55, %p56
      %p58 = scmp.ne.s32.totalorder %s44, %s45
      %p59 = scmp.eq.s32.totalorder %s17, 3
      %p60 = por %p58, %p59
      %p62 = scmp.ne.s32.totalorder %s45, %s61
      %p63 = scmp.eq.s32.totalorder %s17, 0
      %p64 = por %p62, %p63
      %s65 = smul.u32 %s18, 2
      %s66 = sadd.s32 %s65, %s19
      %p67 = scmp.lt.s32.totalorder %s66, 3
      %s68 = scalar_select %p67, %s66, 3
      %s69 = smul.u32 %s30, 2
      %s70 = sadd.s32 %s69, %s26
      %p71 = scmp.lt.s32.totalorder %s70, 3
      %s72 = scalar_select %p71, %s70, 3
      %s73 = ssub.s32 %s68, %s72
      %p74 = scmp.eq.s32.totalorder %s73, 0
      %s76 = sadd.s32 %s75, 1
      %s77 = scalar_select %p74, %s75, %s76
      %p80 = pneg %p74
      %p81 = scmp.eq.s32.totalorder %s11, 3
      %p82 = por %p80, %p81
      %p83 = scmp.ne.s32.totalorder %s75, %s78
      %p84 = scmp.eq.s32.totalorder %s11, 0
      %p85 = por %p83, %p84
      %p86 = scmp.ne.s32.totalorder %s75, %s78
      %p87 = scmp.eq.s32.totalorder %s16, 3
      %p88 = por %p86, %p87
      %p89 = scmp.ne.s32.totalorder %s78, %s79
      %p90 = scmp.eq.s32.totalorder %s16, 0
      %p91 = por %p89, %p90
      %p92 = scmp.ne.s32.totalorder %s78, %s79
      %p93 = scmp.eq.s32.totalorder %s17, 3
      %p94 = por %p92, %p93
      %p96 = scmp.ne.s32.totalorder %s79, %s95
      %p97 = scmp.eq.s32.totalorder %s17, 0
      %p98 = por %p96, %p97
      %s99 = ssub.s32 %s18, %s30
      %p100 = scmp.eq.s32.totalorder %s99, 0
      %s102 = sadd.s32 %s101, 1
      %s103 = scalar_select %p100, %s101, %s102
      %p106 = pneg %p100
      %p107 = scmp.eq.s32.totalorder %s11, 3
      %p108 = por %p106, %p107
      %p109 = scmp.ne.s32.totalorder %s101, %s104
      %p110 = scmp.eq.s32.totalorder %s11, 0
      %p111 = por %p109, %p110
      %p112 = scmp.ne.s32.totalorder %s101, %s104
      %p113 = scmp.eq.s32.totalorder %s16, 3
      %p114 = por %p112, %p113
      %p115 = scmp.ne.s32.totalorder %s104, %s105
      %p116 = scmp.eq.s32.totalorder %s16, 0
      %p117 = por %p115, %p116
      %p118 = scmp.ne.s32.totalorder %s104, %s105
      %p119 = scmp.eq.s32.totalorder %s17, 3
      %p120 = por %p118, %p119
      %p122 = scmp.ne.s32.totalorder %s105, %s121
      %p123 = scmp.eq.s32.totalorder %s17, 0
      %p124 = por %p122, %p123
      %p125 = scmp.le.s32.totalorder 1, %s11
      %p126 = scmp.lt.s32.totalorder %s11, 5
      %p127 = pnand %p125, %p126
      %p128 = pneg %p127
      // Predicated region
      $region9: #{tpu_custom_call.1} parent=5 // pred_check
        _
      $region10: #{tpu_custom_call.1} parent=5 // pred_check_branch
        %130 = sbr.rel (%p127) target = $region12
      $region11: #{tpu_custom_call.1} parent=5 // pred_region
        %s131 = ssub.s32 %s11, 1
      $region12: #{tpu_custom_call.1} parent=5 // pred_fallthru
        _
      %p132 = scmp.lt.s32.totalorder %s11, 4
      // Predicated region
      $region13: #{tpu_custom_call.1} parent=5 // pred_check
        %p133 = pneg %p132
      $region14: #{tpu_custom_call.1} parent=5 // pred_check_branch
        %135 = sbr.rel (%p133) target = $region16
      $region15: #{tpu_custom_call.1} parent=5 // pred_region
        // Predicated region
        $region17: #{tpu_custom_call.1} parent=15 // pred_check
          %p136 = pneg %p51
        $region18: #{tpu_custom_call.1} parent=15 // pred_check_branch
          %138 = sbr.rel (%p136) target = $region20
        $region19: #{tpu_custom_call.1} parent=15 // pred_region
          %s139 = smul.u32 %s18, 2
          %s140 = sadd.s32 %s139, %s19
          %p141 = scmp.lt.s32.totalorder %s140, 3
          %s142 = scalar_select %p141, %s140, 3
          %s143 = smul.u32 16, %s142
          %s144 = ssub.s32 50, %s143
          %p145 = scmp.lt.s32.totalorder %s144, 16
          %s146 = scalar_select %p145, %s144, 16
          %s147 = smul.u32 128, %s146
          %p148 = scmp.lt.s32.totalorder %s143, 49
          %s149 = scalar_select %p148, %s143, 49
          %s150 = smul.addr %s149, 8
          %s151 = scalar_lea.vmem %s0, %s150
          %s152 = smul.u32 %s18, 2
          %s153 = sadd.s32 %s152, %s19
          %p154 = scmp.lt.s32.totalorder %s153, 3
          %s155 = scalar_select %p154, %s153, 3
          %s156 = smul.u32 16, %s155
          %s157 = ssub.s32 50, %s156
          %p158 = scmp.lt.s32.totalorder %s157, 16
          %s159 = scalar_select %p158, %s157, 16
          %s160 = smul.u32 128, %s159
        $region20: #{tpu_custom_call.1} parent=15 // pred_fallthru
          _
        // Predicated region
        $region21: #{tpu_custom_call.1} parent=15 // pred_check
          %p161 = pneg %p85
        $region22: #{tpu_custom_call.1} parent=15 // pred_check_branch
          %163 = sbr.rel (%p161) target = $region24
        $region23: #{tpu_custom_call.1} parent=15 // pred_region
          %s164 = smul.u32 %s18, 2
          %s165 = sadd.s32 %s164, %s19
          %p166 = scmp.lt.s32.totalorder %s165, 3
          %s167 = scalar_select %p166, %s165, 3
          %s168 = smul.u32 16, %s167
          %s169 = ssub.s32 50, %s168
          %p170 = scmp.lt.s32.totalorder %s169, 16
          %s171 = scalar_select %p170, %s169, 16
          %s172 = smul.u32 128, %s171
          %p173 = scmp.lt.s32.totalorder %s168, 49
          %s174 = scalar_select %p173, %s168, 49
          %s175 = smul.addr %s174, 8
          %s176 = scalar_lea.vmem %s1, %s175
          %s177 = smul.u32 %s18, 2
          %s178 = sadd.s32 %s177, %s19
          %p179 = scmp.lt.s32.totalorder %s178, 3
          %s180 = scalar_select %p179, %s178, 3
          %s181 = smul.u32 16, %s180
          %s182 = ssub.s32 50, %s181
          %p183 = scmp.lt.s32.totalorder %s182, 16
          %s184 = scalar_select %p183, %s182, 16
          %s185 = smul.u32 128, %s184
        $region24: #{tpu_custom_call.1} parent=15 // pred_fallthru
          _
      $region16: #{tpu_custom_call.1} parent=5 // pred_fallthru
        _
      %p186 = scmp.le.s32.totalorder 1, %s11
      %p187 = scmp.lt.s32.totalorder %s11, 5
      %p188 = pnand %p186, %p187
      %p189 = pneg %p188
      // Predicated region
      $region25: #{tpu_custom_call.1} parent=5 // pred_check
        _
      $region26: #{tpu_custom_call.1} parent=5 // pred_check_branch
        %191 = sbr.rel (%p188) target = $region28
      $region27: #{tpu_custom_call.1} parent=5 // pred_region
        %s192 = ssub.s32 %s11, 1
        %s193 = smul.u32 %s20, 2
        %s194 = sadd.s32 %s193, %s21
        %p195 = scmp.lt.s32.totalorder %s194, 3
        %s196 = scalar_select %p195, %s194, 3
        %s197 = smul.u32 16, %s196
        %s198 = ssub.s32 50, %s197
        %p199 = scmp.lt.s32.totalorder %s198, 16
        %s200 = scalar_select %p199, %s198, 16
        %s201 = smul.u32 128, %s200
        %p202 = scmp.lt.s32.totalorder %s197, 49
        %s203 = scalar_select %p202, %s197, 49
        %s204 = smul.addr %s203, 8
        %s205 = scalar_lea.vmem %s0, %s204
        %p206 = pneg %p57
        %p207 = pneg %p54
        %s208 = smul.u32 %s20, 2
        %s209 = sadd.s32 %s208, %s21
        %p210 = scmp.lt.s32.totalorder %s209, 3
        %s211 = scalar_select %p210, %s209, 3
        %s212 = smul.u32 16, %s211
        %s213 = ssub.s32 50, %s212
        %p214 = scmp.lt.s32.totalorder %s213, 16
        %s215 = scalar_select %p214, %s213, 16
        %s216 = smul.u32 128, %s215
        %p217 = scmp.lt.s32.totalorder %s212, 49
        %s218 = scalar_select %p217, %s212, 49
        %s219 = smul.addr %s218, 8
        %s220 = scalar_lea.vmem %s1, %s219
        %p221 = pneg %p91
        %p222 = pneg %p88
        %p223 = pneg %p117
        %p224 = pneg %p114
        %s225 = sand.u32 %s104, 1
        %s226 = scalar_lea.sflag [#allocation4], %s225
        %s227 = sand.u32 %s104, 1
        %s228 = smul.addr %s227, 8
        %s229 = scalar_lea.vmem [#allocation3], %s228
        %s230 = smul.u32 %s20, 2
        %s231 = sadd.s32 %s230, %s21
        %p232 = scmp.lt.s32.totalorder %s231, 3
        %s233 = scalar_select %p232, %s231, 3
        %s234 = smul.u32 16, %s233
        %s235 = ssub.s32 50, %s234
        %p236 = scmp.lt.s32.totalorder %s235, 16
        %s237 = scalar_select %p236, %s235, 16
        %s238 = smul.u32 128, %s237
        %p239 = scmp.lt.s32.totalorder %s234, 49
        %s240 = scalar_select %p239, %s234, 49
        %s241 = smul.addr %s240, 8
        %s242 = scalar_lea.vmem %s0, %s241
        %s243 = smul.u32 %s20, 2
        %s244 = sadd.s32 %s243, %s21
        %p245 = scmp.lt.s32.totalorder %s244, 3
        %s246 = scalar_select %p245, %s244, 3
        %s247 = smul.u32 16, %s246
        %s248 = ssub.s32 50, %s247
        %p249 = scmp.lt.s32.totalorder %s248, 16
        %s250 = scalar_select %p249, %s248, 16
        %s251 = smul.u32 128, %s250
        %s252 = smul.u32 %s20, 2
        %s253 = sadd.s32 %s252, %s21
        %p254 = scmp.lt.s32.totalorder %s253, 3
        %s255 = scalar_select %p254, %s253, 3
        %s256 = smul.u32 16, %s255
        %s257 = ssub.s32 50, %s256
        %p258 = scmp.lt.s32.totalorder %s257, 16
        %s259 = scalar_select %p258, %s257, 16
        %s260 = smul.u32 128, %s259
        %p261 = scmp.lt.s32.totalorder %s256, 49
        %s262 = scalar_select %p261, %s256, 49
        %s263 = smul.addr %s262, 8
        %s264 = scalar_lea.vmem %s1, %s263
        %s265 = smul.u32 %s20, 2
        %s266 = sadd.s32 %s265, %s21
        %p267 = scmp.lt.s32.totalorder %s266, 3
        %s268 = scalar_select %p267, %s266, 3
        %s269 = smul.u32 16, %s268
        %s270 = ssub.s32 50, %s269
        %p271 = scmp.lt.s32.totalorder %s270, 16
        %s272 = scalar_select %p271, %s270, 16
        %s273 = smul.u32 128, %s272
        %p274 = scmp.eq.s32.totalorder %s21, 0
        // Predicated region
        $region29: #{tpu_custom_call.1} parent=27 // pred_check
          %p275 = pneg %p274
        $region30: #{tpu_custom_call.1} parent=27 // pred_check_branch
          %277 = sbr.rel (%p275) target = $region32
        $region31: #{tpu_custom_call.1} parent=27 // pred_region
          %s278 = scalar_lea.smem [#allocation2], 0
          %279 = sst [smem:[%s278]] 0.0
        $region32: #{tpu_custom_call.1} parent=27 // pred_fallthru
          _
        %v280 = vld [vmem:[%s242] sm:$0xff]
        %v281 = vld [vmem:[%s242 + $0x8] sm:$0xff]
        %v282 = vld [vmem:[%s242 + $0x10] sm:$0xff]
        %v283 = vld [vmem:[%s242 + $0x18] sm:$0xff]
        %v284 = vld [vmem:[%s242 + $0x20] sm:$0xff]
        %v285 = vld [vmem:[%s242 + $0x28] sm:$0xff]
        %v286 = vld [vmem:[%s242 + $0x30] sm:$0xff]
        %v287 = vld [vmem:[%s242 + $0x38] sm:$0xff]
        %v288 = vld [vmem:[%s242 + $0x40] sm:$0xff]
        %v289 = vld [vmem:[%s242 + $0x48] sm:$0xff]
        %v290 = vld [vmem:[%s242 + $0x50] sm:$0xff]
        %v291 = vld [vmem:[%s242 + $0x58] sm:$0xff]
        %v292 = vld [vmem:[%s242 + $0x60] sm:$0xff]
        %v293 = vld [vmem:[%s242 + $0x68] sm:$0xff]
        %v294 = vld [vmem:[%s242 + $0x70] sm:$0xff]
        %v295 = vld [vmem:[%s242 + $0x78] sm:$0xff]
        %v296 = vld [vmem:[%s264] sm:$0xff]
        %v297 = vld [vmem:[%s264 + $0x8] sm:$0xff]
        %v298 = vld [vmem:[%s264 + $0x10] sm:$0xff]
        %v299 = vld [vmem:[%s264 + $0x18] sm:$0xff]
        %v300 = vld [vmem:[%s264 + $0x20] sm:$0xff]
        %v301 = vld [vmem:[%s264 + $0x28] sm:$0xff]
        %v302 = vld [vmem:[%s264 + $0x30] sm:$0xff]
        %v303 = vld [vmem:[%s264 + $0x38] sm:$0xff]
        %v304 = vld [vmem:[%s264 + $0x40] sm:$0xff]
        %v305 = vld [vmem:[%s264 + $0x48] sm:$0xff]
        %v306 = vld [vmem:[%s264 + $0x50] sm:$0xff]
        %v307 = vld [vmem:[%s264 + $0x58] sm:$0xff]
        %v308 = vld [vmem:[%s264 + $0x60] sm:$0xff]
        %v309 = vld [vmem:[%s264 + $0x68] sm:$0xff]
        %v310 = vld [vmem:[%s264 + $0x70] sm:$0xff]
        %v311 = vld [vmem:[%s264 + $0x78] sm:$0xff]
        %s312 = smul.u32 %s20, 2
        %s313 = sadd.s32 %s312, %s21
        %s314 = smul.u32 %s313, 128
        %v315 = vlaneseq
        %v316 = vshrl.u32 %v315, 7
        %v317 = vadd.s32 %v316, 8
        %v318 = vadd.s32 %v316, 16
        %v319 = vadd.s32 %v316, 24
        %v320 = vadd.s32 %v316, 32
        %v321 = vadd.s32 %v316, 40
        %v322 = vadd.s32 %v316, 48
        %v323 = vadd.s32 %v316, 56
        %v324 = vadd.s32 %v316, 64
        %v325 = vadd.s32 %v316, 72
        %v326 = vadd.s32 %v316, 80
        %v327 = vadd.s32 %v316, 88
        %v328 = vadd.s32 %v316, 96
        %v329 = vadd.s32 %v316, 104
        %v330 = vadd.s32 %v316, 112
        %v331 = vadd.s32 %v316, 120
        %v332 = vstv %s314
        %v333 = vadd.s32 %v332, %v316
        %v334 = vadd.s32 %v332, %v317
        %v335 = vadd.s32 %v332, %v318
        %v336 = vadd.s32 %v332, %v319
        %v337 = vadd.s32 %v332, %v320
        %v338 = vadd.s32 %v332, %v321
        %v339 = vadd.s32 %v332, %v322
        %v340 = vadd.s32 %v332, %v323
        %v341 = vadd.s32 %v332, %v324
        %v342 = vadd.s32 %v332, %v325
        %v343 = vadd.s32 %v332, %v326
        %v344 = vadd.s32 %v332, %v327
        %v345 = vadd.s32 %v332, %v328
        %v346 = vadd.s32 %v332, %v329
        %v347 = vadd.s32 %v332, %v330
        %v348 = vadd.s32 %v332, %v331
        %vm349 = vcmp.lt.s32.totalorder %v333, 400
        %vm350 = vcmp.lt.s32.totalorder %v334, 400
        %vm351 = vcmp.lt.s32.totalorder %v335, 400
        %vm352 = vcmp.lt.s32.totalorder %v336, 400
        %vm353 = vcmp.lt.s32.totalorder %v337, 400
        %vm354 = vcmp.lt.s32.totalorder %v338, 400
        %vm355 = vcmp.lt.s32.totalorder %v339, 400
        %vm356 = vcmp.lt.s32.totalorder %v340, 400
        %vm357 = vcmp.lt.s32.totalorder %v341, 400
        %vm358 = vcmp.lt.s32.totalorder %v342, 400
        %vm359 = vcmp.lt.s32.totalorder %v343, 400
        %vm360 = vcmp.lt.s32.totalorder %v344, 400
        %vm361 = vcmp.lt.s32.totalorder %v345, 400
        %vm362 = vcmp.lt.s32.totalorder %v346, 400
        %vm363 = vcmp.lt.s32.totalorder %v347, 400
        %vm364 = vcmp.lt.s32.totalorder %v348, 400
        %v365 = vsel %vm349, 1, 0
        %v366 = vsel %vm350, 1, 0
        %v367 = vsel %vm351, 1, 0
        %v368 = vsel %vm352, 1, 0
        %v369 = vsel %vm353, 1, 0
        %v370 = vsel %vm354, 1, 0
        %v371 = vsel %vm355, 1, 0
        %v372 = vsel %vm356, 1, 0
        %v373 = vsel %vm357, 1, 0
        %v374 = vsel %vm358, 1, 0
        %v375 = vsel %vm359, 1, 0
        %v376 = vsel %vm360, 1, 0
        %v377 = vsel %vm361, 1, 0
        %v378 = vsel %vm362, 1, 0
        %v379 = vsel %vm363, 1, 0
        %v380 = vsel %vm364, 1, 0
        %vm381 = vcmp.eq.s32.totalorder %v365, 1
        %vm382 = vcmp.eq.s32.totalorder %v366, 1
        %vm383 = vcmp.eq.s32.totalorder %v367, 1
        %vm384 = vcmp.eq.s32.totalorder %v368, 1
        %vm385 = vcmp.eq.s32.totalorder %v369, 1
        %vm386 = vcmp.eq.s32.totalorder %v370, 1
        %vm387 = vcmp.eq.s32.totalorder %v371, 1
        %vm388 = vcmp.eq.s32.totalorder %v372, 1
        %vm389 = vcmp.eq.s32.totalorder %v373, 1
        %vm390 = vcmp.eq.s32.totalorder %v374, 1
        %vm391 = vcmp.eq.s32.totalorder %v375, 1
        %vm392 = vcmp.eq.s32.totalorder %v376, 1
        %vm393 = vcmp.eq.s32.totalorder %v377, 1
        %vm394 = vcmp.eq.s32.totalorder %v378, 1
        %vm395 = vcmp.eq.s32.totalorder %v379, 1
        %vm396 = vcmp.eq.s32.totalorder %v380, 1
        %v397 = vsel %vm381, %v280, 0.0
        %v398 = vsel %vm382, %v281, 0.0
        %v399 = vsel %vm383, %v282, 0.0
        %v400 = vsel %vm384, %v283, 0.0
        %v401 = vsel %vm385, %v284, 0.0
        %v402 = vsel %vm386, %v285, 0.0
        %v403 = vsel %vm387, %v286, 0.0
        %v404 = vsel %vm388, %v287, 0.0
        %v405 = vsel %vm389, %v288, 0.0
        %v406 = vsel %vm390, %v289, 0.0
        %v407 = vsel %vm391, %v290, 0.0
        %v408 = vsel %vm392, %v291, 0.0
        %v409 = vsel %vm393, %v292, 0.0
        %v410 = vsel %vm394, %v293, 0.0
        %v411 = vsel %vm395, %v294, 0.0
        %v412 = vsel %vm396, %v295, 0.0
        %vm413 = vcmask 261120
        %v414 = vsel %vm413, %v397, -inf
        %415 = vmax.xlane.f32.xlu0 %v414
        %v416 = vpop.xlane.xlu0 %415
        %v417 = vsel %vm413, %v398, -inf
        %418 = vmax.xlane.f32.xlu0 %v417
        %v419 = vpop.xlane.xlu0 %418
        %v420 = vsel %vm413, %v399, -inf
        %421 = vmax.xlane.f32.xlu0 %v420
        %v422 = vpop.xlane.xlu0 %421
        %v423 = vsel %vm413, %v400, -inf
        %424 = vmax.xlane.f32.xlu0 %v423
        %v425 = vpop.xlane.xlu0 %424
        %v426 = vsel %vm413, %v401, -inf
        %427 = vmax.xlane.f32.xlu0 %v426
        %v428 = vpop.xlane.xlu0 %427
        %v429 = vsel %vm413, %v402, -inf
        %430 = vmax.xlane.f32.xlu0 %v429
        %v431 = vpop.xlane.xlu0 %430
        %v432 = vsel %vm413, %v403, -inf
        %433 = vmax.xlane.f32.xlu0 %v432
        %v434 = vpop.xlane.xlu0 %433
        %v435 = vsel %vm413, %v404, -inf
        %436 = vmax.xlane.f32.xlu0 %v435
        %v437 = vpop.xlane.xlu0 %436
        %v438 = vsel %vm413, %v405, -inf
        %439 = vmax.xlane.f32.xlu0 %v438
        %v440 = vpop.xlane.xlu0 %439
        %v441 = vsel %vm413, %v406, -inf
        %442 = vmax.xlane.f32.xlu0 %v441
        %v443 = vpop.xlane.xlu0 %442
        %v444 = vsel %vm413, %v407, -inf
        %445 = vmax.xlane.f32.xlu0 %v444
        %v446 = vpop.xlane.xlu0 %445
        %v447 = vsel %vm413, %v408, -inf
        %448 = vmax.xlane.f32.xlu0 %v447
        %v449 = vpop.xlane.xlu0 %448
        %v450 = vsel %vm413, %v409, -inf
        %451 = vmax.xlane.f32.xlu0 %v450
        %v452 = vpop.xlane.xlu0 %451
        %v453 = vsel %vm413, %v410, -inf
        %454 = vmax.xlane.f32.xlu0 %v453
        %v455 = vpop.xlane.xlu0 %454
        %v456 = vsel %vm413, %v411, -inf
        %457 = vmax.xlane.f32.xlu0 %v456
        %v458 = vpop.xlane.xlu0 %457
        %v459 = vsel %vm413, %v412, -inf
        %460 = vmax.xlane.f32.xlu0 %v459
        %v461 = vpop.xlane.xlu0 %460
        %v462 = vsub.f32 %v397, %v416
        %v463 = vsub.f32 %v398, %v419
        %v464 = vsub.f32 %v399, %v422
        %v465 = vsub.f32 %v400, %v425
        %v466 = vsub.f32 %v401, %v428
        %v467 = vsub.f32 %v402, %v431
        %v468 = vsub.f32 %v403, %v434
        %v469 = vsub.f32 %v404, %v437
        %v470 = vsub.f32 %v405, %v440
        %v471 = vsub.f32 %v406, %v443
        %v472 = vsub.f32 %v407, %v446
        %v473 = vsub.f32 %v408, %v449
        %v474 = vsub.f32 %v409, %v452
        %v475 = vsub.f32 %v410, %v455
        %v476 = vsub.f32 %v411, %v458
        %v477 = vsub.f32 %v412, %v461
        %v478 = vmul.f32 %v462, 1.442695
        %v479 = vpow.pop %v478
        %v480 = vmul.f32 %v463, 1.442695
        %v481 = vpow.pop %v480
        %v482 = vmul.f32 %v464, 1.442695
        %v483 = vpow.pop %v482
        %v484 = vmul.f32 %v465, 1.442695
        %v485 = vpow.pop %v484
        %v486 = vmul.f32 %v466, 1.442695
        %v487 = vpow.pop %v486
        %v488 = vmul.f32 %v467, 1.442695
        %v489 = vpow.pop %v488
        %v490 = vmul.f32 %v468, 1.442695
        %v491 = vpow.pop %v490
        %v492 = vmul.f32 %v469, 1.442695
        %v493 = vpow.pop %v492
        %v494 = vmul.f32 %v470, 1.442695
        %v495 = vpow.pop %v494
        %v496 = vmul.f32 %v471, 1.442695
        %v497 = vpow.pop %v496
        %v498 = vmul.f32 %v472, 1.442695
        %v499 = vpow.pop %v498
        %v500 = vmul.f32 %v473, 1.442695
        %v501 = vpow.pop %v500
        %v502 = vmul.f32 %v474, 1.442695
        %v503 = vpow.pop %v502
        %v504 = vmul.f32 %v475, 1.442695
        %v505 = vpow.pop %v504
        %v506 = vmul.f32 %v476, 1.442695
        %v507 = vpow.pop %v506
        %v508 = vmul.f32 %v477, 1.442695
        %v509 = vpow.pop %v508
        %v510 = vsel %vm413, %v479, 0.0
        %511 = vadd.xlane.f32.xlu0 %v510
        %v512 = vpop.xlane.xlu0 %511
        %v513 = vsel %vm413, %v481, 0.0
        %514 = vadd.xlane.f32.xlu0 %v513
        %v515 = vpop.xlane.xlu0 %514
        %v516 = vsel %vm413, %v483, 0.0
        %517 = vadd.xlane.f32.xlu0 %v516
        %v518 = vpop.xlane.xlu0 %517
        %v519 = vsel %vm413, %v485, 0.0
        %520 = vadd.xlane.f32.xlu0 %v519
        %v521 = vpop.xlane.xlu0 %520
        %v522 = vsel %vm413, %v487, 0.0
        %523 = vadd.xlane.f32.xlu0 %v522
        %v524 = vpop.xlane.xlu0 %523
        %v525 = vsel %vm413, %v489, 0.0
        %526 = vadd.xlane.f32.xlu0 %v525
        %v527 = vpop.xlane.xlu0 %526
        %v528 = vsel %vm413, %v491, 0.0
        %529 = vadd.xlane.f32.xlu0 %v528
        %v530 = vpop.xlane.xlu0 %529
        %v531 = vsel %vm413, %v493, 0.0
        %532 = vadd.xlane.f32.xlu0 %v531
        %v533 = vpop.xlane.xlu0 %532
        %v534 = vsel %vm413, %v495, 0.0
        %535 = vadd.xlane.f32.xlu0 %v534
        %v536 = vpop.xlane.xlu0 %535
        %v537 = vsel %vm413, %v497, 0.0
        %538 = vadd.xlane.f32.xlu0 %v537
        %v539 = vpop.xlane.xlu0 %538
        %v540 = vsel %vm413, %v499, 0.0
        %541 = vadd.xlane.f32.xlu0 %v540
        %v542 = vpop.xlane.xlu0 %541
        %v543 = vsel %vm413, %v501, 0.0
        %544 = vadd.xlane.f32.xlu0 %v543
        %v545 = vpop.xlane.xlu0 %544
        %v546 = vsel %vm413, %v503, 0.0
        %547 = vadd.xlane.f32.xlu0 %v546
        %v548 = vpop.xlane.xlu0 %547
        %v549 = vsel %vm413, %v505, 0.0
        %550 = vadd.xlane.f32.xlu0 %v549
        %v551 = vpop.xlane.xlu0 %550
        %v552 = vsel %vm413, %v507, 0.0
        %553 = vadd.xlane.f32.xlu0 %v552
        %v554 = vpop.xlane.xlu0 %553
        %v555 = vsel %vm413, %v509, 0.0
        %556 = vadd.xlane.f32.xlu0 %v555
        %v557 = vpop.xlane.xlu0 %556
        %v558 = vlog2.pop %v512
        %v559 = vmul.f32 %v558, 0.6931472
        %v560 = vlog2.pop %v515
        %v561 = vmul.f32 %v560, 0.6931472
        %v562 = vlog2.pop %v518
        %v563 = vmul.f32 %v562, 0.6931472
        %v564 = vlog2.pop %v521
        %v565 = vmul.f32 %v564, 0.6931472
        %v566 = vlog2.pop %v524
        %v567 = vmul.f32 %v566, 0.6931472
        %v568 = vlog2.pop %v527
        %v569 = vmul.f32 %v568, 0.6931472
        %v570 = vlog2.pop %v530
        %v571 = vmul.f32 %v570, 0.6931472
        %v572 = vlog2.pop %v533
        %v573 = vmul.f32 %v572, 0.6931472
        %v574 = vlog2.pop %v536
        %v575 = vmul.f32 %v574, 0.6931472
        %v576 = vlog2.pop %v539
        %v577 = vmul.f32 %v576, 0.6931472
        %v578 = vlog2.pop %v542
        %v579 = vmul.f32 %v578, 0.6931472
        %v580 = vlog2.pop %v545
        %v581 = vmul.f32 %v580, 0.6931472
        %v582 = vlog2.pop %v548
        %v583 = vmul.f32 %v582, 0.6931472
        %v584 = vlog2.pop %v551
        %v585 = vmul.f32 %v584, 0.6931472
        %v586 = vlog2.pop %v554
        %v587 = vmul.f32 %v586, 0.6931472
        %v588 = vlog2.pop %v557
        %v589 = vmul.f32 %v588, 0.6931472
        %v590 = vadd.f32 %v416, %v559
        %v591 = vadd.f32 %v419, %v561
        %v592 = vadd.f32 %v422, %v563
        %v593 = vadd.f32 %v425, %v565
        %v594 = vadd.f32 %v428, %v567
        %v595 = vadd.f32 %v431, %v569
        %v596 = vadd.f32 %v434, %v571
        %v597 = vadd.f32 %v437, %v573
        %v598 = vadd.f32 %v440, %v575
        %v599 = vadd.f32 %v443, %v577
        %v600 = vadd.f32 %v446, %v579
        %v601 = vadd.f32 %v449, %v581
        %v602 = vadd.f32 %v452, %v583
        %v603 = vadd.f32 %v455, %v585
        %v604 = vadd.f32 %v458, %v587
        %v605 = vadd.f32 %v461, %v589
        %v606 = vlaneseq
        %v607 = vand.u32 %v606, 127
        %608 = vset.pattern.permute.xlu0 0
        %609 = vperm.xlu0 %608, %v296
        %v610 = vpop.permute.xlu0 %609
        %611 = vset.pattern.permute.xlu0 0
        %612 = vperm.xlu0 %611, %v297
        %v613 = vpop.permute.xlu0 %612
        %614 = vset.pattern.permute.xlu0 0
        %615 = vperm.xlu0 %614, %v298
        %v616 = vpop.permute.xlu0 %615
        %617 = vset.pattern.permute.xlu0 0
        %618 = vperm.xlu0 %617, %v299
        %v619 = vpop.permute.xlu0 %618
        %620 = vset.pattern.permute.xlu0 0
        %621 = vperm.xlu0 %620, %v300
        %v622 = vpop.permute.xlu0 %621
        %623 = vset.pattern.permute.xlu0 0
        %624 = vperm.xlu0 %623, %v301
        %v625 = vpop.permute.xlu0 %624
        %626 = vset.pattern.permute.xlu0 0
        %627 = vperm.xlu0 %626, %v302
        %v628 = vpop.permute.xlu0 %627
        %629 = vset.pattern.permute.xlu0 0
        %630 = vperm.xlu0 %629, %v303
        %v631 = vpop.permute.xlu0 %630
        %632 = vset.pattern.permute.xlu0 0
        %633 = vperm.xlu0 %632, %v304
        %v634 = vpop.permute.xlu0 %633
        %635 = vset.pattern.permute.xlu0 0
        %636 = vperm.xlu0 %635, %v305
        %v637 = vpop.permute.xlu0 %636
        %638 = vset.pattern.permute.xlu0 0
        %639 = vperm.xlu0 %638, %v306
        %v640 = vpop.permute.xlu0 %639
        %641 = vset.pattern.permute.xlu0 0
        %642 = vperm.xlu0 %641, %v307
        %v643 = vpop.permute.xlu0 %642
        %644 = vset.pattern.permute.xlu0 0
        %645 = vperm.xlu0 %644, %v308
        %v646 = vpop.permute.xlu0 %645
        %647 = vset.pattern.permute.xlu0 0
        %648 = vperm.xlu0 %647, %v309
        %v649 = vpop.permute.xlu0 %648
        %650 = vset.pattern.permute.xlu0 0
        %651 = vperm.xlu0 %650, %v310
        %v652 = vpop.permute.xlu0 %651
        %653 = vset.pattern.permute.xlu0 0
        %654 = vperm.xlu0 %653, %v311
        %v655 = vpop.permute.xlu0 %654
        %vm656 = vcmp.eq.s32.totalorder %v607, %v610
        %vm657 = vcmp.eq.s32.totalorder %v607, %v613
        %vm658 = vcmp.eq.s32.totalorder %v607, %v616
        %vm659 = vcmp.eq.s32.totalorder %v607, %v619
        %vm660 = vcmp.eq.s32.totalorder %v607, %v622
        %vm661 = vcmp.eq.s32.totalorder %v607, %v625
        %vm662 = vcmp.eq.s32.totalorder %v607, %v628
        %vm663 = vcmp.eq.s32.totalorder %v607, %v631
        %vm664 = vcmp.eq.s32.totalorder %v607, %v634
        %vm665 = vcmp.eq.s32.totalorder %v607, %v637
        %vm666 = vcmp.eq.s32.totalorder %v607, %v640
        %vm667 = vcmp.eq.s32.totalorder %v607, %v643
        %vm668 = vcmp.eq.s32.totalorder %v607, %v646
        %vm669 = vcmp.eq.s32.totalorder %v607, %v649
        %vm670 = vcmp.eq.s32.totalorder %v607, %v652
        %vm671 = vcmp.eq.s32.totalorder %v607, %v655
        %v672 = vsel %vm656, 1, 0
        %v673 = vsel %vm657, 1, 0
        %v674 = vsel %vm658, 1, 0
        %v675 = vsel %vm659, 1, 0
        %v676 = vsel %vm660, 1, 0
        %v677 = vsel %vm661, 1, 0
        %v678 = vsel %vm662, 1, 0
        %v679 = vsel %vm663, 1, 0
        %v680 = vsel %vm664, 1, 0
        %v681 = vsel %vm665, 1, 0
        %v682 = vsel %vm666, 1, 0
        %v683 = vsel %vm667, 1, 0
        %v684 = vsel %vm668, 1, 0
        %v685 = vsel %vm669, 1, 0
        %v686 = vsel %vm670, 1, 0
        %v687 = vsel %vm671, 1, 0
        %v688 = vcvt.s32.f32 %v672
        %v689 = vcvt.s32.f32 %v673
        %v690 = vcvt.s32.f32 %v674
        %v691 = vcvt.s32.f32 %v675
        %v692 = vcvt.s32.f32 %v676
        %v693 = vcvt.s32.f32 %v677
        %v694 = vcvt.s32.f32 %v678
        %v695 = vcvt.s32.f32 %v679
        %v696 = vcvt.s32.f32 %v680
        %v697 = vcvt.s32.f32 %v681
        %v698 = vcvt.s32.f32 %v682
        %v699 = vcvt.s32.f32 %v683
        %v700 = vcvt.s32.f32 %v684
        %v701 = vcvt.s32.f32 %v685
        %v702 = vcvt.s32.f32 %v686
        %v703 = vcvt.s32.f32 %v687
        %v704 = vmul.f32 %v397, %v688
        %v705 = vmul.f32 %v398, %v689
        %v706 = vmul.f32 %v399, %v690
        %v707 = vmul.f32 %v400, %v691
        %v708 = vmul.f32 %v401, %v692
        %v709 = vmul.f32 %v402, %v693
        %v710 = vmul.f32 %v403, %v694
        %v711 = vmul.f32 %v404, %v695
        %v712 = vmul.f32 %v405, %v696
        %v713 = vmul.f32 %v406, %v697
        %v714 = vmul.f32 %v407, %v698
        %v715 = vmul.f32 %v408, %v699
        %v716 = vmul.f32 %v409, %v700
        %v717 = vmul.f32 %v410, %v701
        %v718 = vmul.f32 %v411, %v702
        %v719 = vmul.f32 %v412, %v703
        %v720 = vsel %vm413, %v704, 0.0
        %721 = vadd.xlane.f32.xlu0 %v720
        %v722 = vpop.xlane.xlu0 %721
        %v723 = vsel %vm413, %v705, 0.0
        %724 = vadd.xlane.f32.xlu0 %v723
        %v725 = vpop.xlane.xlu0 %724
        %v726 = vsel %vm413, %v706, 0.0
        %727 = vadd.xlane.f32.xlu0 %v726
        %v728 = vpop.xlane.xlu0 %727
        %v729 = vsel %vm413, %v707, 0.0
        %730 = vadd.xlane.f32.xlu0 %v729
        %v731 = vpop.xlane.xlu0 %730
        %v732 = vsel %vm413, %v708, 0.0
        %733 = vadd.xlane.f32.xlu0 %v732
        %v734 = vpop.xlane.xlu0 %733
        %v735 = vsel %vm413, %v709, 0.0
        %736 = vadd.xlane.f32.xlu0 %v735
        %v737 = vpop.xlane.xlu0 %736
        %v738 = vsel %vm413, %v710, 0.0
        %739 = vadd.xlane.f32.xlu0 %v738
        %v740 = vpop.xlane.xlu0 %739
        %v741 = vsel %vm413, %v711, 0.0
        %742 = vadd.xlane.f32.xlu0 %v741
        %v743 = vpop.xlane.xlu0 %742
        %v744 = vsel %vm413, %v712, 0.0
        %745 = vadd.xlane.f32.xlu0 %v744
        %v746 = vpop.xlane.xlu0 %745
        %v747 = vsel %vm413, %v713, 0.0
        %748 = vadd.xlane.f32.xlu0 %v747
        %v749 = vpop.xlane.xlu0 %748
        %v750 = vsel %vm413, %v714, 0.0
        %751 = vadd.xlane.f32.xlu0 %v750
        %v752 = vpop.xlane.xlu0 %751
        %v753 = vsel %vm413, %v715, 0.0
        %754 = vadd.xlane.f32.xlu0 %v753
        %v755 = vpop.xlane.xlu0 %754
        %v756 = vsel %vm413, %v716, 0.0
        %757 = vadd.xlane.f32.xlu0 %v756
        %v758 = vpop.xlane.xlu0 %757
        %v759 = vsel %vm413, %v717, 0.0
        %760 = vadd.xlane.f32.xlu0 %v759
        %v761 = vpop.xlane.xlu0 %760
        %v762 = vsel %vm413, %v718, 0.0
        %763 = vadd.xlane.f32.xlu0 %v762
        %v764 = vpop.xlane.xlu0 %763
        %v765 = vsel %vm413, %v719, 0.0
        %766 = vadd.xlane.f32.xlu0 %v765
        %v767 = vpop.xlane.xlu0 %766
        %v768 = vsub.f32 %v722, %v590
        %v769 = vsub.f32 %v725, %v591
        %v770 = vsub.f32 %v728, %v592
        %v771 = vsub.f32 %v731, %v593
        %v772 = vsub.f32 %v734, %v594
        %v773 = vsub.f32 %v737, %v595
        %v774 = vsub.f32 %v740, %v596
        %v775 = vsub.f32 %v743, %v597
        %v776 = vsub.f32 %v746, %v598
        %v777 = vsub.f32 %v749, %v599
        %v778 = vsub.f32 %v752, %v600
        %v779 = vsub.f32 %v755, %v601
        %v780 = vsub.f32 %v758, %v602
        %v781 = vsub.f32 %v761, %v603
        %v782 = vsub.f32 %v764, %v604
        %v783 = vsub.f32 %v767, %v605
        %v784 = vmul.f32 %v768, 1.442695
        %v785 = vpow.pop %v784
        %v786 = vmul.f32 %v769, 1.442695
        %v787 = vpow.pop %v786
        %v788 = vmul.f32 %v770, 1.442695
        %v789 = vpow.pop %v788
        %v790 = vmul.f32 %v771, 1.442695
        %v791 = vpow.pop %v790
        %v792 = vmul.f32 %v772, 1.442695
        %v793 = vpow.pop %v792
        %v794 = vmul.f32 %v773, 1.442695
        %v795 = vpow.pop %v794
        %v796 = vmul.f32 %v774, 1.442695
        %v797 = vpow.pop %v796
        %v798 = vmul.f32 %v775, 1.442695
        %v799 = vpow.pop %v798
        %v800 = vmul.f32 %v776, 1.442695
        %v801 = vpow.pop %v800
        %v802 = vmul.f32 %v777, 1.442695
        %v803 = vpow.pop %v802
        %v804 = vmul.f32 %v778, 1.442695
        %v805 = vpow.pop %v804
        %v806 = vmul.f32 %v779, 1.442695
        %v807 = vpow.pop %v806
        %v808 = vmul.f32 %v780, 1.442695
        %v809 = vpow.pop %v808
        %v810 = vmul.f32 %v781, 1.442695
        %v811 = vpow.pop %v810
        %v812 = vmul.f32 %v782, 1.442695
        %v813 = vpow.pop %v812
        %v814 = vmul.f32 %v783, 1.442695
        %v815 = vpow.pop %v814
        %v816 = vsub.f32 1.0, %v785
        %v817 = vsub.f32 1.0, %v787
        %v818 = vsub.f32 1.0, %v789
        %v819 = vsub.f32 1.0, %v791
        %v820 = vsub.f32 1.0, %v793
        %v821 = vsub.f32 1.0, %v795
        %v822 = vsub.f32 1.0, %v797
        %v823 = vsub.f32 1.0, %v799
        %v824 = vsub.f32 1.0, %v801
        %v825 = vsub.f32 1.0, %v803
        %v826 = vsub.f32 1.0, %v805
        %v827 = vsub.f32 1.0, %v807
        %v828 = vsub.f32 1.0, %v809
        %v829 = vsub.f32 1.0, %v811
        %v830 = vsub.f32 1.0, %v813
        %v831 = vsub.f32 1.0, %v815
        %v832 = vmul.f32 %v816, %v816
        %v833 = vmul.f32 %v817, %v817
        %v834 = vmul.f32 %v818, %v818
        %v835 = vmul.f32 %v819, %v819
        %v836 = vmul.f32 %v820, %v820
        %v837 = vmul.f32 %v821, %v821
        %v838 = vmul.f32 %v822, %v822
        %v839 = vmul.f32 %v823, %v823
        %v840 = vmul.f32 %v824, %v824
        %v841 = vmul.f32 %v825, %v825
        %v842 = vmul.f32 %v826, %v826
        %v843 = vmul.f32 %v827, %v827
        %v844 = vmul.f32 %v828, %v828
        %v845 = vmul.f32 %v829, %v829
        %v846 = vmul.f32 %v830, %v830
        %v847 = vmul.f32 %v831, %v831
        %v848 = vmul.f32 %v832, %v768
        %v849 = vmul.f32 %v833, %v769
        %v850 = vmul.f32 %v834, %v770
        %v851 = vmul.f32 %v835, %v771
        %v852 = vmul.f32 %v836, %v772
        %v853 = vmul.f32 %v837, %v773
        %v854 = vmul.f32 %v838, %v774
        %v855 = vmul.f32 %v839, %v775
        %v856 = vmul.f32 %v840, %v776
        %v857 = vmul.f32 %v841, %v777
        %v858 = vmul.f32 %v842, %v778
        %v859 = vmul.f32 %v843, %v779
        %v860 = vmul.f32 %v844, %v780
        %v861 = vmul.f32 %v845, %v781
        %v862 = vmul.f32 %v846, %v782
        %v863 = vmul.f32 %v847, %v783
        %s864 = sld [smem:[#allocation2]]
        %v865 = vsub.f32 0.0, %v848
        %v866 = vsub.f32 0.0, %v849
        %v867 = vsub.f32 0.0, %v850
        %v868 = vsub.f32 0.0, %v851
        %v869 = vsub.f32 0.0, %v852
        %v870 = vsub.f32 0.0, %v853
        %v871 = vsub.f32 0.0, %v854
        %v872 = vsub.f32 0.0, %v855
        %v873 = vsub.f32 0.0, %v856
        %v874 = vsub.f32 0.0, %v857
        %v875 = vsub.f32 0.0, %v858
        %v876 = vsub.f32 0.0, %v859
        %v877 = vsub.f32 0.0, %v860
        %v878 = vsub.f32 0.0, %v861
        %v879 = vsub.f32 0.0, %v862
        %v880 = vsub.f32 0.0, %v863
        %v881 = vsel %vm349, %v865, 0.0
        %v882 = vsel %vm350, %v866, 0.0
        %v883 = vsel %vm351, %v867, 0.0
        %v884 = vsel %vm352, %v868, 0.0
        %v885 = vsel %vm353, %v869, 0.0
        %v886 = vsel %vm354, %v870, 0.0
        %v887 = vsel %vm355, %v871, 0.0
        %v888 = vsel %vm356, %v872, 0.0
        %v889 = vsel %vm357, %v873, 0.0
        %v890 = vsel %vm358, %v874, 0.0
        %v891 = vsel %vm359, %v875, 0.0
        %v892 = vsel %vm360, %v876, 0.0
        %v893 = vsel %vm361, %v877, 0.0
        %v894 = vsel %vm362, %v878, 0.0
        %v895 = vsel %vm363, %v879, 0.0
        %v896 = vsel %vm364, %v880, 0.0
        %vm897 = vcmask 7168
        %v898 = vsel %vm897, %v881, 0.0
        %v899 = vsel %vm897, %v882, 0.0
        %v900 = vadd.f32 %v898, %v899
        %v901 = vsel %vm897, %v883, 0.0
        %v902 = vadd.f32 %v900, %v901
        %v903 = vsel %vm897, %v884, 0.0
        %v904 = vadd.f32 %v902, %v903
        %v905 = vsel %vm897, %v885, 0.0
        %v906 = vadd.f32 %v904, %v905
        %v907 = vsel %vm897, %v886, 0.0
        %v908 = vadd.f32 %v906, %v907
        %v909 = vsel %vm897, %v887, 0.0
        %v910 = vadd.f32 %v908, %v909
        %v911 = vsel %vm897, %v888, 0.0
        %v912 = vadd.f32 %v910, %v911
        %v913 = vsel %vm897, %v889, 0.0
        %v914 = vadd.f32 %v912, %v913
        %v915 = vsel %vm897, %v890, 0.0
        %v916 = vadd.f32 %v914, %v915
        %v917 = vsel %vm897, %v891, 0.0
        %v918 = vadd.f32 %v916, %v917
        %v919 = vsel %vm897, %v892, 0.0
        %v920 = vadd.f32 %v918, %v919
        %v921 = vsel %vm897, %v893, 0.0
        %v922 = vadd.f32 %v920, %v921
        %v923 = vsel %vm897, %v894, 0.0
        %v924 = vadd.f32 %v922, %v923
        %v925 = vsel %vm897, %v895, 0.0
        %v926 = vadd.f32 %v924, %v925
        %v927 = vsel %vm897, %v896, 0.0
        %v928 = vadd.f32 %v926, %v927
        %929 = vadd.xlane.f32.xlu0 %v928
        %v930 = vpop.xlane.xlu0 %929
        %v931 = vrot.slane %v930, 4
        %v932 = vadd.f32 %v930, %v931
        %v933 = vrot.slane %v932, 2
        %v934 = vadd.f32 %v932, %v933
        %v935 = vrot.slane %v934, 1
        %v936 = vadd.f32 %v934, %v935
        %s937 = vtos %v936
        %s938 = sadd.f32 %s864, %s937
        %s939 = scalar_lea.smem [#allocation2], 0
        %940 = sst [smem:[%s939]] %s938
        %p941 = scmp.eq.s32.totalorder %s21, 1
        // Predicated region
        $region33: #{tpu_custom_call.1} parent=27 // pred_check
          %p942 = pneg %p941
        $region34: #{tpu_custom_call.1} parent=27 // pred_check_branch
          %944 = sbr.rel (%p942) target = $region36
        $region35: #{tpu_custom_call.1} parent=27 // pred_region
          %s945 = sld [smem:[#allocation2]]
          %v946 = vstv %s945
          %947 = vst [vmem:[%s229] sm:$0xff] %v946
        $region36: #{tpu_custom_call.1} parent=27 // pred_fallthru
          _
        %s948 = sand.u32 %s104, 1
        %s949 = scalar_lea.sflag [#allocation4], %s948
        %s950 = sand.u32 %s104, 1
        %s951 = smul.addr %s950, 8
        %s952 = scalar_lea.vmem [#allocation3], %s951
        // Predicated region
        $region37: #{tpu_custom_call.1} parent=27 // pred_check
          %p953 = pneg %p114
        $region38: #{tpu_custom_call.1} parent=27 // pred_check_branch
          %955 = sbr.rel (%p953) target = $region40
        $region39: #{tpu_custom_call.1} parent=27 // pred_region
          %s957 = ssub.s32 128, 128
          %958 = vsyncadd %s949, %s957
          %s959 = smul.addr %s20, 128
          %s960 = scalar_lea.hbm %s2, %s959
          %s962 = sshll.u32 %s952, 4
          %s963 = int_to_ptr.vmem [resolvable:$true] %s962
          %965 = dma.vmem_to_hbm [thread:$0]  %s963, 128, %s960, %s949
        $region40: #{tpu_custom_call.1} parent=27 // pred_fallthru
          _
      $region28: #{tpu_custom_call.1} parent=5 // pred_fallthru
        _
      %p966 = scmp.le.s32.totalorder 2, %s11
      // Predicated region
      $region41: #{tpu_custom_call.1} parent=5 // pred_check
        %p967 = pneg %p966
      $region42: #{tpu_custom_call.1} parent=5 // pred_check_branch
        %969 = sbr.rel (%p967) target = $region44
      $region43: #{tpu_custom_call.1} parent=5 // pred_region
        %s970 = ssub.s32 %s11, 2
        // Predicated region
        $region45: #{tpu_custom_call.1} parent=43 // pred_check
          %p971 = pneg %p120
        $region46: #{tpu_custom_call.1} parent=43 // pred_check_branch
          %973 = sbr.rel (%p971) target = $region48
        $region47: #{tpu_custom_call.1} parent=43 // pred_region
          %s974 = sand.u32 %s105, 1
          %s975 = scalar_lea.sflag [#allocation4], %s974
          %s976 = sand.u32 %s105, 1
          %s977 = smul.addr %s976, 8
          %s978 = scalar_lea.vmem [#allocation3], %s977
          %979 = dma.done %s975, 128
        $region48: #{tpu_custom_call.1} parent=43 // pred_fallthru
          _
      $region44: #{tpu_custom_call.1} parent=5 // pred_fallthru
        _
    $region6: #{tpu_custom_call.1} parent=1 // loop_footer
      %s15 = sadd.s32 1, %s11
    $region7: #{tpu_custom_call.1} parent=1 // loop_footer_branch
      %10 = sbr.rel target = $region3
    $region8: #{tpu_custom_call.1} parent=1 // loop_exit
      _
    %980 = vsyncpa [#allocation4], 1
    %s981 = scalar_lea.sflag [#allocation4], 1
    %982 = vsyncpa %s981, 1

</llo_original>
